<compile_context>
chip_gen: v5e
topology: v5e:2x2
jax: 0.10.0
libtpu: 0.0.40
codegen_flags: <defaults>
</compile_context>

<pallas_src>
import functools
import math

import jax
import jax.numpy as jnp
from jax.experimental import pallas as pl
from jax.experimental.pallas import tpu as pltpu


_MAX_LANES_FULL = 8192   # take the full column extent as one block up to this


# ---------------------------------------------------------------------------
# Generation-aware budgets.
# ---------------------------------------------------------------------------
@functools.lru_cache(maxsize=1)
def _tpu_budget():
    """(target_block_bytes, vmem_limit_bytes). 2 bufs x 3 arrays x target must
    stay under the limit, and the limit under physical VMEM per TensorCore."""
    target = 2 * 1024 * 1024          # conservative defaults, safe everywhere
    limit = 32 * 1024 * 1024
    try:
        info = pltpu.get_tpu_info()
        vmem = getattr(info, "vmem_capacity_bytes", None)
        if vmem:
            if vmem >= 96 * 1024 * 1024:     # v5e / v6e: 128 MiB per TC
                target = 8 * 1024 * 1024
                limit = 64 * 1024 * 1024
            else:                            # v7x: 64 MiB per TC
                target = 4 * 1024 * 1024
                limit = 48 * 1024 * 1024
    except Exception:
        pass
    return target, limit


# ---------------------------------------------------------------------------
# Tiling helpers.
# ---------------------------------------------------------------------------
def _sublane_multiple(*dtypes):
    m = 8
    for dt in dtypes:
        b = jnp.dtype(dt).itemsize
        if b == 2:
            m = max(m, 16)
        elif b == 1:
            m = max(m, 32)
    return m


def _pick_lanes(n):
    """Largest multiple-of-128 divisor of n (capped at 8192), or None."""
    if n <= 0 or n % 128 != 0:
        return None
    start = min(_MAX_LANES_FULL, n)
    for c in range(start, 127, -128):
        if n % c == 0:
            return c
    return 128


def _plan_view(shape):
    """Lane-dense 2D (R, C) view of a contiguous array of this shape."""
    n = math.prod(shape)
    c = _pick_lanes(n)
    if c is None:
        c = shape[-1]
    return n // c, c


def _plan_cols(ctot):
    """Column block width: full extent when modest, else a multiple of 128."""
    if ctot <= _MAX_LANES_FULL:
        return ctot
    for tn in range(_MAX_LANES_FULL, 127, -128):
        if ctot % tn == 0:
            return tn
    return 2048        # ragged last column block (fine for elementwise ops)


def _plan_rows(r, tn, itemsize, sub, target):
    """Rows per block ~ target bytes, multiple of the sublane packing.
    Budgets the *physical* footprint (lanes < 128 pad to 128 in VMEM)."""
    row_bytes = max(tn, 128) * itemsize
    tm = max(1, target // row_bytes)
    tm = max((tm // sub) * sub, sub)
    return r if tm >= r else tm


def _cap_two_steps(tm, r, sub, other_steps):
    """Shrink the row block so the overall grid has >= 2 steps (v7x has two
    TensorCores; a 1-step grid leaves one idle). No-op when already >= 2
    steps or when r is too small to split on sublane-aligned blocks."""
    if other_steps >= 2 or r <= sub or tm < r:
        return tm
    cap = ((r + 1) // 2) // sub * sub
    return cap if cap >= sub else sub


def _compiler_params(semantics, vmem_limit):
    return pltpu.CompilerParams(
        dimension_semantics=semantics,
        vmem_limit_bytes=vmem_limit,
    )


def _cost(flops, bytes_accessed):
    return pl.CostEstimate(flops=flops, transcendentals=0,
                           bytes_accessed=bytes_accessed)


# ---------------------------------------------------------------------------
# Kernel bodies (dtype promotion happens in-kernel).
# ---------------------------------------------------------------------------
def _merge_op(a, b, merge_type):
    if merge_type == "add":
        return a + b
    if merge_type == "subtract":
        return a - b
    return a * b


def _eq_kernel(a_ref, b_ref, o_ref, *, merge_type):
    a = a_ref[...].astype(o_ref.dtype)
    b = b_ref[...].astype(o_ref.dtype)
    o_ref[...] = _merge_op(a, b, merge_type)


def _bcast_kernel(big_ref, small_ref, o_ref, *, merge_type, big_is_first):
    big = big_ref[...].astype(o_ref.dtype)
    small = small_ref[...].astype(o_ref.dtype)   # (1,1)/(1,K)/(1,tm,tn) bcasts
    if big_is_first:
        o_ref[...] = _merge_op(big, small, merge_type)
    else:
        o_ref[...] = _merge_op(small, big, merge_type)


# ---------------------------------------------------------------------------
# pallas_call builders.
# ---------------------------------------------------------------------------
def _merge_equal(x1, x2, merge_type, out_dtype, target, vmem_limit):
    """Both operands have identical shape: lane-dense 2D tiles."""
    shape = x1.shape
    n = math.prod(shape)
    r, ctot = _plan_view(shape)
    a2 = x1.reshape(r, ctot)
    b2 = x2.reshape(r, ctot)

    sub = _sublane_multiple(x1.dtype, x2.dtype, out_dtype)
    itemsize = jnp.dtype(out_dtype).itemsize
    tn = _plan_cols(ctot)
    col_steps = pl.cdiv(ctot, tn)
    tm = _plan_rows(r, tn, itemsize, sub, target)
    tm = _cap_two_steps(tm, r, sub, col_steps)
    grid = (pl.cdiv(r, tm), col_steps)

    kernel = functools.partial(_eq_kernel, merge_type=merge_type)
    out2 = pl.pallas_call(
        kernel,
        out_shape=jax.ShapeDtypeStruct((r, ctot), out_dtype),
        grid_spec=pltpu.PrefetchScalarGridSpec(
            num_scalar_prefetch=0,
            grid=grid,
            in_specs=[
                pl.BlockSpec((tm, tn), lambda i, j: (i, j)),
                pl.BlockSpec((tm, tn), lambda i, j: (i, j)),
            ],
            out_specs=pl.BlockSpec((tm, tn), lambda i, j: (i, j)),
        ),
        compiler_params=_compiler_params(("parallel", "parallel"), vmem_limit),
        cost_estimate=_cost(
            n, n * (x1.dtype.itemsize + x2.dtype.itemsize + itemsize)),
    )(a2, b2)
    return out2.reshape(shape)


def _merge_scalar(big, small, merge_type, out_dtype, big_is_first,
                  target, vmem_limit):
    """`small` has exactly one element: keep it as a resident (1,1) VMEM block
    (constant index_map) and broadcast in-kernel — nothing is materialized."""
    shape = big.shape
    n = math.prod(shape)
    r, ctot = _plan_view(shape)
    big2 = big.reshape(r, ctot)
    small2 = small.reshape(1, 1)

    sub = _sublane_multiple(big.dtype, small.dtype, out_dtype)
    itemsize = jnp.dtype(out_dtype).itemsize
    tn = _plan_cols(ctot)
    col_steps = pl.cdiv(ctot, tn)
    tm = _plan_rows(r, tn, itemsize, sub, target)
    tm = _cap_two_steps(tm, r, sub, col_steps)
    grid = (pl.cdiv(r, tm), col_steps)

    kernel = functools.partial(_bcast_kernel, merge_type=merge_type,
                               big_is_first=big_is_first)
    out2 = pl.pallas_call(
        kernel,
        out_shape=jax.ShapeDtypeStruct((r, ctot), out_dtype),
        grid_spec=pltpu.PrefetchScalarGridSpec(
            num_scalar_prefetch=0,
            grid=grid,
            in_specs=[
                pl.BlockSpec((tm, tn), lambda i, j: (i, j)),
                pl.BlockSpec((1, 1), lambda i, j: (0, 0)),
            ],
            out_specs=pl.BlockSpec((tm, tn), lambda i, j: (i, j)),
        ),
        compiler_params=_compiler_params(("parallel", "parallel"), vmem_limit),
        cost_estimate=_cost(
            n, n * (big.dtype.itemsize + itemsize) + small.dtype.itemsize),
    )(big2, small2)
    return out2.reshape(shape)


def _merge_bias(big, small_suffix, merge_type, out_dtype, big_is_first,
                target, vmem_limit):
    """Tiny suffix operand: fully resident as a single (1, K) block; big's
    leading dims are folded onto the sublane axis (classic bias-add layout)."""
    k = math.prod(small_suffix.shape)
    n_big = math.prod(big.shape)
    bprod = n_big // k
    big2 = big.reshape(bprod, k)
    small2 = small_suffix.reshape(1, k)

    sub = _sublane_multiple(big.dtype, small_suffix.dtype, out_dtype)
    itemsize = jnp.dtype(out_dtype).itemsize
    tb = _plan_rows(bprod, k, itemsize, sub, target)
    tb = _cap_two_steps(tb, bprod, sub, 1)
    grid = (pl.cdiv(bprod, tb),)

    kernel = functools.partial(_bcast_kernel, merge_type=merge_type,
                               big_is_first=big_is_first)
    out2 = pl.pallas_call(
        kernel,
        out_shape=jax.ShapeDtypeStruct((bprod, k), out_dtype),
        grid_spec=pltpu.PrefetchScalarGridSpec(
            num_scalar_prefetch=0,
            grid=grid,
            in_specs=[
                pl.BlockSpec((tb, k), lambda i: (i, 0)),
                pl.BlockSpec((1, k), lambda i: (0, 0)),
            ],
            out_specs=pl.BlockSpec((tb, k), lambda i: (i, 0)),
        ),
        compiler_params=_compiler_params(("parallel",), vmem_limit),
        cost_estimate=_cost(
            n_big,
            n_big * (big.dtype.itemsize + itemsize)
            + k * small_suffix.dtype.itemsize),
    )(big2, small2)
    return out2.reshape(big.shape)


def _merge_bcast_resident(big, small_suffix, merge_type, out_dtype,
                          big_is_first, target, vmem_limit):
    """Larger suffix operand: lane-dense 2D view of the suffix; batch axis is
    innermost in the grid so the small block index never changes across it
    (fetched once, no re-DMA); the broadcast is never materialized in HBM."""
    k = math.prod(small_suffix.shape)
    n_big = math.prod(big.shape)
    bprod = n_big // k
    c = _pick_lanes(k)
    if c is None:
        c = small_suffix.shape[-1]
    rs = k // c
    big3 = big.reshape(bprod, rs, c)
    small3 = small_suffix.reshape(1, rs, c)

    sub = _sublane_multiple(big.dtype, small_suffix.dtype, out_dtype)
    itemsize = jnp.dtype(out_dtype).itemsize
    tn = _plan_cols(c)
    col_steps = pl.cdiv(c, tn)
    tm = _plan_rows(rs, tn, itemsize, sub, target)
    tm = _cap_two_steps(tm, rs, sub, col_steps * bprod)
    grid = (pl.cdiv(rs, tm), col_steps, bprod)   # batch innermost

    kernel = functools.partial(_bcast_kernel, merge_type=merge_type,
                               big_is_first=big_is_first)
    out3 = pl.pallas_call(
        kernel,
        out_shape=jax.ShapeDtypeStruct((bprod, rs, c), out_dtype),
        grid_spec=pltpu.PrefetchScalarGridSpec(
            num_scalar_prefetch=0,
            grid=grid,
            in_specs=[
                pl.BlockSpec((1, tm, tn), lambda i, j, b: (b, i, j)),
                pl.BlockSpec((1, tm, tn), lambda i, j, b: (0, i, j)),
            ],
            out_specs=pl.BlockSpec((1, tm, tn), lambda i, j, b: (b, i, j)),
        ),
        compiler_params=_compiler_params(
            ("parallel", "parallel", "parallel"), vmem_limit),
        cost_estimate=_cost(
            n_big,
            n_big * (big.dtype.itemsize + itemsize)
            + k * small_suffix.dtype.itemsize),
    )(big3, small3)
    return out3.reshape(big.shape)


def _merge_suffix_broadcast(big, small_suffix, merge_type, out_dtype,
                            big_is_first, target, vmem_limit):
    sub = _sublane_multiple(big.dtype, small_suffix.dtype, out_dtype)
    itemsize = jnp.dtype(out_dtype).itemsize
    k = math.prod(small_suffix.shape)
    # Threshold is target // (2 * sub) so that even the minimum sublane-rounded
    # row count keeps the big/out block <= ~target/2 (no block-size blow-up).
    if k * itemsize <= target // (2 * sub):
        return _merge_bias(big, small_suffix, merge_type, out_dtype,
                           big_is_first, target, vmem_limit)
    return _merge_bcast_resident(big, small_suffix, merge_type, out_dtype,
                                 big_is_first, target, vmem_limit)


# ---------------------------------------------------------------------------
# Public entry point.
# ---------------------------------------------------------------------------
def merge_streams(x1, x2, merge_type="add"):
    """Pallas implementation of MergeStreams.forward (one output stream)."""
    assert merge_type in ("add", "subtract", "multiply")
    x1 = jnp.asarray(x1)
    x2 = jnp.asarray(x2)
    out_shape = jnp.broadcast_shapes(x1.shape, x2.shape)
    out_dtype = jnp.result_type(x1, x2)
    target, vmem_limit = _tpu_budget()

    if len(out_shape) == 0 or math.prod(out_shape) == 0:
        # Degenerate scalar-scalar / empty merge: nothing to tile.
        a = jnp.broadcast_to(x1, out_shape).astype(out_dtype)
        b = jnp.broadcast_to(x2, out_shape).astype(out_dtype)
        return _merge_op(a, b, merge_type)

    if x1.shape == x2.shape:
        return _merge_equal(x1, x2, merge_type, out_dtype, target, vmem_limit)

    # Identify the full-output-shape ("big") operand.
    big = small = None
    big_is_first = True
    if x1.shape == out_shape:
        big, small, big_is_first = x1, x2, True
    elif x2.shape == out_shape:
        big, small, big_is_first = x2, x1, False

    if big is not None:
        if small.size == 1:
            # Scalar / all-size-1 operand: resident (1,1) block, broadcast
            # in-kernel — no HBM materialization of the broadcast.
            return _merge_scalar(big, small, merge_type, out_dtype,
                                 big_is_first, target, vmem_limit)
        # Right-align ranks; suffix broadcast works whenever every dim the
        # small operand broadcasts over is a leading dim (after squeezing its
        # leading size-1 dims).
        s_pad = (1,) * (big.ndim - small.ndim) + tuple(small.shape)
        suffix_len = 0
        while (suffix_len < big.ndim and
               s_pad[big.ndim - 1 - suffix_len]
               == big.shape[big.ndim - 1 - suffix_len]):
            suffix_len += 1
        if suffix_len == big.ndim:
            # Shapes differ only by leading size-1 dims: plain reshape.
            small_r = small.reshape(big.shape)
            if big_is_first:
                return _merge_equal(big, small_r, merge_type, out_dtype,
                                    target, vmem_limit)
            return _merge_equal(small_r, big, merge_type, out_dtype,
                                target, vmem_limit)
        if suffix_len >= 1 and all(
                d == 1 for d in s_pad[: big.ndim - suffix_len]):
            suffix_shape = big.shape[big.ndim - suffix_len:]
            return _merge_suffix_broadcast(
                big, small.reshape(suffix_shape), merge_type, out_dtype,
                big_is_first, target, vmem_limit)

    # TODO(synk): interior / two-sided size-1 broadcasts (neither operand has
    # the full output shape, or a middle/trailing dim is broadcast) still
    # materialize the broadcast in XLA before the kernel.
    a = jnp.broadcast_to(x1, out_shape)
    b = jnp.broadcast_to(x2, out_shape)
    return _merge_equal(a, b, merge_type, out_dtype, target, vmem_limit)


class MergeStreamsPallas:
    """Mirrors the PyTorch MergeStreams module (no learnable params)."""

    def __init__(self, config, _streams):
        self.input_name_1 = config.get("input_name_1", "x")
        self.input_name_2 = config.get("input_name_2", "x")
        self.output_name = config.get("output_name", "x")
        self.merge_name = config.get("merge_type", "add")
        assert self.merge_name in ("add", "multiply", "subtract")
        self.input_shape_1 = _streams[self.input_name_1]
        self.input_shape_2 = _streams[self.input_name_2]
        if len(self.input_shape_1) < len(self.input_shape_2):
            self.output_shape = self.input_shape_2
        else:
            self.output_shape = self.input_shape_1
        self.streams_in_module = {
            "inputs": [[self.input_name_1, self.input_shape_1],
                       [self.input_name_2, self.input_shape_2]],
            "outputs": [[self.output_name, self.output_shape]],
        }

    def forward(self, _data):
        _data[self.output_name] = merge_streams(
            _data[self.input_name_1],
            _data[self.input_name_2],
            merge_type=self.merge_name,
        )
        return _data


if __name__ == "__main__":
    key = jax.random.PRNGKey(0)
    k1, k2, k3, k4, k5 = jax.random.split(key, 5)

    failures = []

    def _check(name, got, ref, atol=1e-6, rtol=1e-6):
        got = jax.block_until_ready(got)
        if (got.shape != ref.shape or
                not jnp.allclose(got.astype(jnp.float32),
                                 ref.astype(jnp.float32),
                                 atol=atol, rtol=rtol)):
            failures.append(name)

    # --- Module-level test: [B,S,D] stream merged with [S,D] stream ---------
    B, S, D = 2, 8, 32
    x1 = jax.random.normal(k1, (B, S, D), dtype=jnp.float32)
    x2 = jax.random.normal(k2, (S, D), dtype=jnp.float32)
    streams = {"a": [B, S, D], "b": [S, D]}

    refs = {"add": x1 + x2, "subtract": x1 - x2, "multiply": x1 * x2}
    for merge_type in ("add", "subtract", "multiply"):
        cfg = {"input_name_1": "a", "input_name_2": "b",
               "output_name": "out", "merge_type": merge_type}
        mod = MergeStreamsPallas(cfg, streams)
        out = mod.forward({"a": x1, "b": x2})["out"]
        _check(f"bcast/{merge_type}", out, refs[merge_type])

    # --- Reversed operand order (lower-rank operand first) ------------------
    out = merge_streams(x2, x1, merge_type="subtract")
    _check("bcast_rev/subtract", out, x2 - x1)

    # --- Equal-shape path ----------------------------------------------------
    x3 = jax.random.normal(k3, (B, S, D), dtype=jnp.float32)
    out = merge_streams(x1, x3, merge_type="multiply")
    _check("equal/multiply", out, x1 * x3)

    # --- Mixed dtype (cast happens inside the kernel) ------------------------
    x4 = jax.random.normal(k4, (S, D), dtype=jnp.bfloat16)
    out = merge_streams(x1, x4, merge_type="add")
    _check("mixed_dtype/add", out, x1 + x4.astype(jnp.float32))

    # --- Scalar operand path (resident (1,1) block, no materialization) -----
    s = jnp.asarray(2.5, dtype=jnp.float32)
    out = merge_streams(x1, s, merge_type="multiply")
    _check("scalar/multiply", out, x1 * 2.5)
    out = merge_streams(s, x1, merge_type="subtract")
    _check("scalar_rev/subtract", out, 2.5 - x1)

    # --- Leading size-1 dims squeeze into the bias path ----------------------
    x5 = jax.random.normal(k5, (1, S, D), dtype=jnp.float32)
    out = merge_streams(x1, x5, merge_type="add")
    _check("lead1/add", out, x1 + x5)

    # --- Medium equal-shape (exercises >=2 grid-step row capping) -----------
    z1 = jax.random.normal(k3, (256, 2048), dtype=jnp.float32)
    z2 = jax.random.normal(k4, (256, 2048), dtype=jnp.float32)
    out = merge_streams(z1, z2, merge_type="subtract")
    _check("equal_med/subtract", out, z1 - z2)

    # --- Larger broadcast (resident-suffix regime, lane-dense view) ----------
    y1 = jax.random.normal(k5, (2, 512, 640), dtype=jnp.float32)
    y2 = jax.random.normal(k2, (512, 640), dtype=jnp.float32)
    out = merge_streams(y1, y2, merge_type="add")
    _check("bcast_large/add", out, y1 + y2)

    if failures:
        print("MISMATCH:", ", ".join(failures))
    else:
        print("KERNEL_OK")
</pallas_src>

<mosaic_0001>
module attributes {stable_mosaic.version = 11 : i64} {
  func.func @_bcast_kernel(%arg0: i32, %arg1: memref<2x256xf32, #tpu.memory_space<vmem>>, %arg2: memref<1x256xf32, #tpu.memory_space<vmem>>, %arg3: memref<2x256xf32, #tpu.memory_space<vmem>>) attributes {dimension_semantics = [#tpu.dimension_semantics<parallel>], iteration_bounds = array<i64: 1>, scalar_prefetch = 0 : i64, scratch_operands = 0 : i64, tpu.core_type = #tpu.core_type<tc>, window_params = [{transform_indices = @transform_0, window_bounds = array<i64: 2, 256>}, {pipeline_mode = #tpu.pipeline_mode<synchronous>, transform_indices = @transform_1, window_bounds = array<i64: 1, 256>}, {transform_indices = @transform_2, window_bounds = array<i64: 2, 256>}]} {
    %c0 = arith.constant 0 : index
    %c0_0 = arith.constant 0 : index
    %0 = vector.load %arg1[%c0, %c0_0] : memref<2x256xf32, #tpu.memory_space<vmem>>, vector<2x256xf32>
    %c0_1 = arith.constant 0 : index
    %c0_2 = arith.constant 0 : index
    %1 = vector.load %arg2[%c0_1, %c0_2] : memref<1x256xf32, #tpu.memory_space<vmem>>, vector<1x256xf32>
    %2 = vector.broadcast %1 : vector<1x256xf32> to vector<2x256xf32>
    %3 = arith.addf %0, %2 : vector<2x256xf32>
    %c0_3 = arith.constant 0 : index
    %c0_4 = arith.constant 0 : index
    %4 = vector.load %arg3[%c0_3, %c0_4] : memref<2x256xf32, #tpu.memory_space<vmem>>, vector<2x256xf32>
    tpu.vector_store %arg3[%c0_3, %c0_4], %3 {strides = array<i32>} : memref<2x256xf32, #tpu.memory_space<vmem>>, vector<2x256xf32>,
    return
  }
  func.func @transform_0(%arg0: i32) -> (i32, i32) {
    %c0_i32 = arith.constant 0 : i32
    %c0_i32_0 = arith.constant 0 : i32
    return %arg0, %c0_i32 : i32, i32
  }
  func.func @transform_1(%arg0: i32) -> (i32, i32) {
    %c0_i32 = arith.constant 0 : i32
    %c0_i32_0 = arith.constant 0 : i32
    %c0_i32_1 = arith.constant 0 : i32
    return %c0_i32, %c0_i32_0 : i32, i32
  }
  func.func @transform_2(%arg0: i32) -> (i32, i32) {
    %c0_i32 = arith.constant 0 : i32
    %c0_i32_0 = arith.constant 0 : i32
    return %arg0, %c0_i32 : i32, i32
  }
}

</mosaic_0001>

<llo_original>
// kernel: tpu_custom_call.1
$region0: #{tpu_custom_call.1}
  #allocation0 [shape = 'u32[]', space=smem, size = 0x4, offset = 0x4, fixed_abs, tag = 'smem constant byte address 0x4 - core index']
  #allocation1 [shape = 'u32[72,128]{1,0:T(1,128)}', space=vmem, size = 0x9000, scoped, tag = 'internal scratch']
  %s0 = inlined_call_operand.hbm [shape: f32[2,256], index: 0, kind: input, shape index: {}]
  %s1 = inlined_call_operand.hbm [shape: f32[1,256], index: 1, kind: input, shape index: {}]
  %s2 = inlined_call_operand.hbm [shape: f32[2,256], index: 2, kind: output, shape index: {}]
  %s3 = sld [smem:[#allocation0]]
  $region26: #{tpu_custom_call.1} parent=0
    _
  %s5 = ssub.s32 1, %s3
  %s6 = scalar_select 0, %s5, %s3
  $region1: #{tpu_custom_call.1} parent=0
    #allocation2 [shape = 'u8[2048]{0}', space=vmem, size = 0x800, scoped, tag = 'input window, operand 0, single buffered']
    #allocation3 [shape = 's32[1]{0}', space=sflag, size = 0x4, scoped, tag = 'scoped memory for tpu_custom_call.1']
    #allocation4 [shape = 's32[1]{0}', space=sflag, size = 0x4, scoped, tag = 'scoped memory for tpu_custom_call.1']
    #allocation5 [shape = 'u8[1024]{0}', space=vmem, size = 0x400, scoped, tag = 'input window, operand 1, single buffered']
    #allocation6 [shape = 's32[1]{0}', space=sflag, size = 0x4, scoped, tag = 'scoped memory for tpu_custom_call.1']
    #allocation7 [shape = 'u8[2048]{0}', space=vmem, size = 0x800, scoped, tag = 'output window, operand 0, single buffered']
    %7 = vsyncpa [#allocation3], 0
    %8 = vsyncpa [#allocation6], 0
    %9 = vsyncpa [#allocation4], 0
    // Predicated region
    $region2: #{tpu_custom_call.1} parent=1 // pred_check
      _
    $region3: #{tpu_custom_call.1} parent=1 // pred_check_branch
      %11 = sbr.rel (0) target = $region5
    $region4: #{tpu_custom_call.1} parent=1 // pred_region
      %13 = vsyncadd [#allocation3], 0
      %s15 = sshll.u32 %s0, 4
      %s16 = int_to_ptr.hbm [resolvable:$true] %s15
      %s17 = sshll.u32 [#allocation2], 4
      %s18 = int_to_ptr.vmem [resolvable:$true] %s17
      %20 = dma.hbm_to_vmem [thread:$0]  %s16, 64, %s18, [#allocation3]
    $region5: #{tpu_custom_call.1} parent=1 // pred_fallthru
      _
    // Predicated region
    $region6: #{tpu_custom_call.1} parent=1 // pred_check
      _
    $region7: #{tpu_custom_call.1} parent=1 // pred_check_branch
      %22 = sbr.rel (0) target = $region9
    $region8: #{tpu_custom_call.1} parent=1 // pred_region
      %24 = vsyncadd [#allocation6], 0
      %s26 = sshll.u32 %s1, 4
      %s27 = int_to_ptr.hbm [resolvable:$true] %s26
      %s28 = sshll.u32 [#allocation5], 4
      %s29 = int_to_ptr.vmem [resolvable:$true] %s28
      %31 = dma.hbm_to_vmem [thread:$0]  %s27, 32, %s29, [#allocation6]
    $region9: #{tpu_custom_call.1} parent=1 // pred_fallthru
      _
    // Predicated region
    $region10: #{tpu_custom_call.1} parent=1 // pred_check
      _
    $region11: #{tpu_custom_call.1} parent=1 // pred_check_branch
      %33 = sbr.rel (0) target = $region13
    $region12: #{tpu_custom_call.1} parent=1 // pred_region
      %35 = dma.done [#allocation3], 64
    $region13: #{tpu_custom_call.1} parent=1 // pred_fallthru
      _
    // Predicated region
    $region14: #{tpu_custom_call.1} parent=1 // pred_check
      _
    $region15: #{tpu_custom_call.1} parent=1 // pred_check_branch
      %37 = sbr.rel (0) target = $region17
    $region16: #{tpu_custom_call.1} parent=1 // pred_region
      %39 = dma.done [#allocation6], 32
    $region17: #{tpu_custom_call.1} parent=1 // pred_fallthru
      _
    %v40 = vld [vmem:[#allocation2] sm:$0xf]
    %v41 = vld [vmem:[#allocation5] sm:$0x3]
    %v43 = vperm.slane %v41, 0
    %v44 = vperm.slane %v41, 1
    %v45 = vrot.slane %v44, 6
    %vm46 = vcmask 1041408
    %v47 = vsel %vm46, %v43, %v45
    %v49 = vadd.f32 %v40, %v47
    %50 = vst [vmem:[#allocation7] sm:$0xf] %v49
    // Predicated region
    $region18: #{tpu_custom_call.1} parent=1 // pred_check
      _
    $region19: #{tpu_custom_call.1} parent=1 // pred_check_branch
      %52 = sbr.rel (0) target = $region21
    $region20: #{tpu_custom_call.1} parent=1 // pred_region
      %54 = vsyncadd [#allocation4], 0
      %s56 = sshll.u32 [#allocation7], 4
      %s57 = int_to_ptr.vmem [resolvable:$true] %s56
      %s58 = sshll.u32 %s2, 4
      %s59 = int_to_ptr.hbm [resolvable:$true] %s58
      %61 = dma.vmem_to_hbm [thread:$0]  %s57, 64, %s59, [#allocation4]
    $region21: #{tpu_custom_call.1} parent=1 // pred_fallthru
      _
    // Predicated region
    $region22: #{tpu_custom_call.1} parent=1 // pred_check
      _
    $region23: #{tpu_custom_call.1} parent=1 // pred_check_branch
      %63 = sbr.rel (0) target = $region25
    $region24: #{tpu_custom_call.1} parent=1 // pred_region
      %65 = dma.done [#allocation4], 64
    $region25: #{tpu_custom_call.1} parent=1 // pred_fallthru
      _
    %66 = vsyncpa [#allocation3], 1
    %67 = vsyncpa [#allocation6], 1
    %68 = vsyncpa [#allocation4], 1

</llo_original>
